<compile_context>
chip_gen: v7x
topology: tpu7x:2x2x1
jax: 0.10.0
libtpu: 0.0.40
codegen_flags: <defaults>
</compile_context>

<pallas_src>
import functools

import jax
import jax.numpy as jnp
from jax.experimental import pallas as pl
from jax.experimental.pallas import tpu as pltpu

LANE = 128
SUBLANE = 8
NEG_BIG = -1e30  # finite "minus infinity" baked into padded logit-bias lanes


def _round_up(n, m):
    return (n + m - 1) // m * m


def _mlp_kernel(x_ref, w1_ref, b1_ref, w2_ref, b2_ref, w3_ref, b3_ref, out_ref):
    # Cast the streamed f32 x tile to bf16 in-kernel (saves a wrapper HBM pass).
    x_bf = x_ref[...].astype(jnp.bfloat16)

    # Hidden layer 1: Linear (bf16 MXU, f32 acc) + bias + ReLU (f32 VPU).
    h = jnp.dot(x_bf, w1_ref[...], preferred_element_type=jnp.float32)
    h = jnp.maximum(h + b1_ref[...], 0.0)

    # Hidden layer 2 (zero-padded 64->128 columns; ReLU(0+0)=0 so identical).
    h = jnp.dot(h.astype(jnp.bfloat16), w2_ref[...],
                preferred_element_type=jnp.float32)
    h = jnp.maximum(h + b2_ref[...], 0.0)

    # Output layer.  Padded logit lanes get zero w3 columns and a -1e30 bias
    # (baked in at param-prep time) so they vanish under max/exp-sum with no
    # per-step masking cost.
    logits = jnp.dot(h.astype(jnp.bfloat16), w3_ref[...],
                     preferred_element_type=jnp.float32)
    logits = logits + b3_ref[...]

    # Numerically stable log_softmax over dim=1.
    m = jnp.max(logits, axis=1, keepdims=True)
    shifted = logits - m
    lse = jnp.log(jnp.sum(jnp.exp(shifted), axis=1, keepdims=True))
    out_ref[...] = shifted - lse


def prepare_params(w1, b1, w2, b2, w3, b3):
    """One-time (load-time) padding/casting of parameters.

    Weights are expected in (in, out) layout (transposed vs PyTorch nn.Linear).
    Returns (padded_params_tuple, out_units).  Padded lanes of b3 are set to
    -1e30 so the kernel needs no explicit logit mask.
    """
    in_units, h1_units = w1.shape
    h2_units = w2.shape[1]
    out_units = w3.shape[1]

    in_p = _round_up(in_units, LANE)
    h1_p = _round_up(h1_units, LANE)
    h2_p = _round_up(h2_units, LANE)
    out_p = _round_up(out_units, LANE)

    def pad2(a, rows, cols, dtype):
        a = jnp.asarray(a, dtype)
        if a.ndim == 1:
            a = a.reshape(1, -1)
        return jnp.pad(a, ((0, rows - a.shape[0]), (0, cols - a.shape[1])))

    w1_p = pad2(w1, in_p, h1_p, jnp.bfloat16)
    w2_p = pad2(w2, h1_p, h2_p, jnp.bfloat16)
    w3_p = pad2(w3, h2_p, out_p, jnp.bfloat16)
    b1_p = pad2(b1, 1, h1_p, jnp.float32)
    b2_p = pad2(b2, 1, h2_p, jnp.float32)
    b3_p = pad2(b3, 1, out_p, jnp.float32)
    if out_p > out_units:
        b3_p = b3_p.at[:, out_units:].set(NEG_BIG)

    return (w1_p, b1_p, w2_p, b2_p, w3_p, b3_p), out_units


@functools.partial(jax.jit, static_argnames=("out_units",))
def _classifier_forward_padded(x, w1_p, b1_p, w2_p, b2_p, w3_p, b3_p, *,
                               out_units):
    batch = x.shape[0]
    x2d = x.reshape(batch, -1).astype(jnp.float32)  # x.view(B, -1)

    in_units = x2d.shape[1]
    in_p, h1_p = w1_p.shape
    h2_p = w2_p.shape[1]
    out_p = w3_p.shape[1]

    # Batch tiling: large tiles (<=2048 rows) so the ~0.35 us/step grid
    # overhead is small vs. the tile's DMA time.  If more than one tile is
    # needed, keep grid >= 2 so the "parallel" axis can shard across v7x's
    # two TensorCores.
    b_p0 = _round_up(batch, SUBLANE)
    tb = min(2048, b_p0)
    if b_p0 > tb:
        tb = min(tb, _round_up(-(-b_p0 // 2), SUBLANE))
    b_p = _round_up(b_p0, tb)
    grid = (b_p // tb,)

    # Pad x only where required (batch rows, and lanes if in_units % 128 != 0).
    # Kept in f32: the bf16 cast happens per-tile inside the kernel.
    x_p = jnp.pad(x2d, ((0, b_p - batch), (0, in_p - in_units)))

    # Advisory cost estimate for the XLA scheduler.
    flops = 2 * b_p * (in_p * h1_p + h1_p * h2_p + h2_p * out_p)
    transcendentals = b_p * (out_p + 1)  # exp + log per row
    bytes_accessed = (x_p.size * 4
                      + (w1_p.size + w2_p.size + w3_p.size) * 2
                      + (b1_p.size + b2_p.size + b3_p.size) * 4
                      + b_p * out_p * 4)

    # VMEM budget from the actual resident set: double-buffered x/out streams,
    # resident weights (constant index_map), in-kernel temporaries, headroom.
    weight_bytes = ((w1_p.size + w2_p.size + w3_p.size) * 2
                    + (b1_p.size + b2_p.size + b3_p.size) * 4)
    temp_bytes = tb * (in_p * 2                       # bf16 x copy
                       + (h1_p + h2_p + out_p) * 4    # f32 activations
                       + out_p * 4)                   # epilogue temps
    vmem_limit = (2 * tb * in_p * 4       # x tiles, f32, double-buffered
                  + 2 * tb * out_p * 4    # out tiles, f32, double-buffered
                  + 2 * weight_bytes
                  + temp_bytes
                  + (2 << 20))

    const_block = lambda shape: pl.BlockSpec(shape, lambda i: (0, 0))

    out_padded = pl.pallas_call(
        _mlp_kernel,
        out_shape=jax.ShapeDtypeStruct((b_p, out_p), jnp.float32),
        grid=grid,
        in_specs=[
            pl.BlockSpec((tb, in_p), lambda i: (i, 0)),   # x: streamed per tile
            const_block((in_p, h1_p)),                    # weights: resident
            const_block((1, h1_p)),
            const_block((h1_p, h2_p)),
            const_block((1, h2_p)),
            const_block((h2_p, out_p)),
            const_block((1, out_p)),
        ],
        out_specs=pl.BlockSpec((tb, out_p), lambda i: (i, 0)),
        compiler_params=pltpu.CompilerParams(
            dimension_semantics=("parallel",),
            vmem_limit_bytes=int(vmem_limit)),
        cost_estimate=pl.CostEstimate(
            flops=int(flops),
            transcendentals=int(transcendentals),
            bytes_accessed=int(bytes_accessed)),
    )(x_p, w1_p, b1_p, w2_p, b2_p, w3_p, b3_p)

    # Strip batch/lane padding.
    return out_padded[:batch, :out_units]


def classifier_forward(x, padded_params, out_units):
    """x: (B, C, H, W). padded_params: output of prepare_params."""
    return _classifier_forward_padded(x, *padded_params, out_units=out_units)


def init_params(key, input_units, hidden_units, output_units):
    """Deterministic init mimicking nn.Linear's U(-1/sqrt(fan_in), 1/sqrt(fan_in)).
    Weights returned in (in, out) layout (transposed vs PyTorch)."""
    dims = [input_units] + list(hidden_units) + [output_units]
    params = []
    for fan_in, fan_out in zip(dims[:-1], dims[1:]):
        key, kw, kb = jax.random.split(key, 3)
        bound = 1.0 / jnp.sqrt(jnp.float32(fan_in))
        w = jax.random.uniform(kw, (fan_in, fan_out), jnp.float32, -bound, bound)
        b = jax.random.uniform(kb, (1, fan_out), jnp.float32, -bound, bound)
        params.append((w, b))
    return params


def _reference_forward(x, w1, b1, w2, b2, w3, b3):
    """Pure-JAX f32 reference of the PyTorch module (eval mode)."""
    h = x.reshape(x.shape[0], -1).astype(jnp.float32)
    h = jnp.maximum(h @ w1 + b1, 0.0)
    h = jnp.maximum(h @ w2 + b2, 0.0)
    logits = h @ w3 + b3
    return jax.nn.log_softmax(logits, axis=1)


if __name__ == "__main__":
    # Shapes consistent with the module's forward:
    #   x: (batch=2, channels=4, 16x16) -> input_units = 4*16*16 = 1024
    #   hidden_units = [128, 64], output_units = 10, drop_rate = 0.5 (eval mode)
    batch, channels, spatial = 2, 4, 16
    input_units = channels * spatial * spatial
    hidden_units = [128, 64]
    output_units = 10

    key = jax.random.PRNGKey(0)
    key, kx = jax.random.split(key)
    x = jax.random.normal(kx, (batch, channels, spatial, spatial), jnp.float32)

    (w1, b1), (w2, b2), (w3, b3) = init_params(
        key, input_units, hidden_units, output_units
    )

    # One-time parameter prep (padding + bf16 cast + bias-baked logit mask).
    padded_params, out_units = prepare_params(w1, b1, w2, b2, w3, b3)

    out = classifier_forward(x, padded_params, out_units)
    out = jax.block_until_ready(out)

    # Sanity checks: shape, valid log-probabilities, close to f32 reference.
    assert out.shape == (batch, output_units)
    row_sums = jnp.sum(jnp.exp(out), axis=1)
    assert bool(jnp.all(jnp.abs(row_sums - 1.0) < 1e-4))

    ref = _reference_forward(x, w1, b1, w2, b2, w3, b3)
    # bf16 MXU operands (f32 accumulation) vs f32 reference -> loose tolerance.
    assert bool(jnp.all(jnp.abs(out - ref) < 0.1))

    print("KERNEL_OK")
</pallas_src>

<mosaic_0001>
module attributes {stable_mosaic.version = 11 : i64} {
  func.func @_mlp_kernel(%arg0: i32, %arg1: memref<8x1024xf32, #tpu.memory_space<vmem>>, %arg2: memref<1024x128xbf16, #tpu.memory_space<vmem>>, %arg3: memref<1x128xf32, #tpu.memory_space<vmem>>, %arg4: memref<128x128xbf16, #tpu.memory_space<vmem>>, %arg5: memref<1x128xf32, #tpu.memory_space<vmem>>, %arg6: memref<128x128xbf16, #tpu.memory_space<vmem>>, %arg7: memref<1x128xf32, #tpu.memory_space<vmem>>, %arg8: memref<8x128xf32, #tpu.memory_space<vmem>>) attributes {dimension_semantics = [#tpu.dimension_semantics<parallel>], iteration_bounds = array<i64: 1>, scalar_prefetch = 0 : i64, scratch_operands = 0 : i64, tpu.core_type = #tpu.core_type<tc>, window_params = [{transform_indices = @transform_0, window_bounds = array<i64: 8, 1024>}, {pipeline_mode = #tpu.pipeline_mode<synchronous>, transform_indices = @transform_1, window_bounds = array<i64: 1024, 128>}, {pipeline_mode = #tpu.pipeline_mode<synchronous>, transform_indices = @transform_2, window_bounds = array<i64: 1, 128>}, {pipeline_mode = #tpu.pipeline_mode<synchronous>, transform_indices = @transform_3, window_bounds = array<i64: 128, 128>}, {pipeline_mode = #tpu.pipeline_mode<synchronous>, transform_indices = @transform_4, window_bounds = array<i64: 1, 128>}, {pipeline_mode = #tpu.pipeline_mode<synchronous>, transform_indices = @transform_5, window_bounds = array<i64: 128, 128>}, {pipeline_mode = #tpu.pipeline_mode<synchronous>, transform_indices = @transform_6, window_bounds = array<i64: 1, 128>}, {transform_indices = @transform_7, window_bounds = array<i64: 8, 128>}]} {
    %c0 = arith.constant 0 : index
    %c0_0 = arith.constant 0 : index
    %0 = vector.load %arg1[%c0, %c0_0] : memref<8x1024xf32, #tpu.memory_space<vmem>>, vector<8x1024xf32>
    %1 = arith.truncf %0 : vector<8x1024xf32> to vector<8x1024xbf16>
    %c0_1 = arith.constant 0 : index
    %c0_2 = arith.constant 0 : index
    %2 = vector.load %arg2[%c0_1, %c0_2] : memref<1024x128xbf16, #tpu.memory_space<vmem>>, vector<1024x128xbf16>
    %cst = arith.constant dense<0.000000e+00> : vector<8x128xf32>
    %3 = tpu.matmul %1, %2, %cst {dimension_numbers = #tpu.dot_dimension_numbers<[1], [0], [0], [1], [0, 0, 1, 1], [], []>} : vector<8x1024xbf16>, vector<1024x128xbf16>, vector<8x128xf32> -> vector<8x128xf32>
    %c0_3 = arith.constant 0 : index
    %c0_4 = arith.constant 0 : index
    %4 = vector.load %arg3[%c0_3, %c0_4] : memref<1x128xf32, #tpu.memory_space<vmem>>, vector<1x128xf32>
    %5 = vector.broadcast %4 : vector<1x128xf32> to vector<8x128xf32>
    %6 = arith.addf %3, %5 : vector<8x128xf32>
    %cst_5 = arith.constant 0.000000e+00 : f32
    %7 = vector.broadcast %cst_5 : f32 to vector<8x128xf32>
    %8 = arith.maximumf %6, %7 : vector<8x128xf32>
    %9 = arith.truncf %8 : vector<8x128xf32> to vector<8x128xbf16>
    %c0_6 = arith.constant 0 : index
    %c0_7 = arith.constant 0 : index
    %10 = vector.load %arg4[%c0_6, %c0_7] : memref<128x128xbf16, #tpu.memory_space<vmem>>, vector<128x128xbf16>
    %cst_8 = arith.constant dense<0.000000e+00> : vector<8x128xf32>
    %11 = tpu.matmul %9, %10, %cst_8 {dimension_numbers = #tpu.dot_dimension_numbers<[1], [0], [0], [1], [0, 0, 1, 1], [], []>} : vector<8x128xbf16>, vector<128x128xbf16>, vector<8x128xf32> -> vector<8x128xf32>
    %c0_9 = arith.constant 0 : index
    %c0_10 = arith.constant 0 : index
    %12 = vector.load %arg5[%c0_9, %c0_10] : memref<1x128xf32, #tpu.memory_space<vmem>>, vector<1x128xf32>
    %13 = vector.broadcast %12 : vector<1x128xf32> to vector<8x128xf32>
    %14 = arith.addf %11, %13 : vector<8x128xf32>
    %cst_11 = arith.constant 0.000000e+00 : f32
    %15 = vector.broadcast %cst_11 : f32 to vector<8x128xf32>
    %16 = arith.maximumf %14, %15 : vector<8x128xf32>
    %17 = arith.truncf %16 : vector<8x128xf32> to vector<8x128xbf16>
    %c0_12 = arith.constant 0 : index
    %c0_13 = arith.constant 0 : index
    %18 = vector.load %arg6[%c0_12, %c0_13] : memref<128x128xbf16, #tpu.memory_space<vmem>>, vector<128x128xbf16>
    %cst_14 = arith.constant dense<0.000000e+00> : vector<8x128xf32>
    %19 = tpu.matmul %17, %18, %cst_14 {dimension_numbers = #tpu.dot_dimension_numbers<[1], [0], [0], [1], [0, 0, 1, 1], [], []>} : vector<8x128xbf16>, vector<128x128xbf16>, vector<8x128xf32> -> vector<8x128xf32>
    %c0_15 = arith.constant 0 : index
    %c0_16 = arith.constant 0 : index
    %20 = vector.load %arg7[%c0_15, %c0_16] : memref<1x128xf32, #tpu.memory_space<vmem>>, vector<1x128xf32>
    %21 = vector.broadcast %20 : vector<1x128xf32> to vector<8x128xf32>
    %22 = arith.addf %19, %21 : vector<8x128xf32>
    %cst_17 = arith.constant dense<0xFF800000> : vector<8xf32>
    %23 = vector.multi_reduction <maximumf>, %22, %cst_17 [1] : vector<8x128xf32> to vector<8xf32>
    %24 = vector.shape_cast %23 : vector<8xf32> to vector<8x1xf32>
    %25 = vector.broadcast %24 : vector<8x1xf32> to vector<8x128xf32>
    %26 = arith.subf %22, %25 : vector<8x128xf32>
    %27 = math.exp %26 : vector<8x128xf32>
    %cst_18 = arith.constant dense<0.000000e+00> : vector<8xf32>
    %28 = vector.multi_reduction <add>, %27, %cst_18 [1] : vector<8x128xf32> to vector<8xf32>
    %29 = vector.shape_cast %28 : vector<8xf32> to vector<8x1xf32>
    %30 = math.log %29 : vector<8x1xf32>
    %31 = vector.broadcast %30 : vector<8x1xf32> to vector<8x128xf32>
    %32 = arith.subf %26, %31 : vector<8x128xf32>
    %c0_19 = arith.constant 0 : index
    %c0_20 = arith.constant 0 : index
    %33 = vector.load %arg8[%c0_19, %c0_20] : memref<8x128xf32, #tpu.memory_space<vmem>>, vector<8x128xf32>
    tpu.vector_store %arg8[%c0_19, %c0_20], %32 {strides = array<i32>} : memref<8x128xf32, #tpu.memory_space<vmem>>, vector<8x128xf32>,
    return
  }
  func.func @transform_0(%arg0: i32) -> (i32, i32) {
    %c0_i32 = arith.constant 0 : i32
    %c0_i32_0 = arith.constant 0 : i32
    return %arg0, %c0_i32 : i32, i32
  }
  func.func @transform_1(%arg0: i32) -> (i32, i32) {
    %c0_i32 = arith.constant 0 : i32
    %c0_i32_0 = arith.constant 0 : i32
    %c0_i32_1 = arith.constant 0 : i32
    return %c0_i32, %c0_i32_0 : i32, i32
  }
  func.func @transform_2(%arg0: i32) -> (i32, i32) {
    %c0_i32 = arith.constant 0 : i32
    %c0_i32_0 = arith.constant 0 : i32
    %c0_i32_1 = arith.constant 0 : i32
    return %c0_i32, %c0_i32_0 : i32, i32
  }
  func.func @transform_3(%arg0: i32) -> (i32, i32) {
    %c0_i32 = arith.constant 0 : i32
    %c0_i32_0 = arith.constant 0 : i32
    %c0_i32_1 = arith.constant 0 : i32
    return %c0_i32, %c0_i32_0 : i32, i32
  }
  func.func @transform_4(%arg0: i32) -> (i32, i32) {
    %c0_i32 = arith.constant 0 : i32
    %c0_i32_0 = arith.constant 0 : i32
    %c0_i32_1 = arith.constant 0 : i32
    return %c0_i32, %c0_i32_0 : i32, i32
  }
  func.func @transform_5(%arg0: i32) -> (i32, i32) {
    %c0_i32 = arith.constant 0 : i32
    %c0_i32_0 = arith.constant 0 : i32
    %c0_i32_1 = arith.constant 0 : i32
    return %c0_i32, %c0_i32_0 : i32, i32
  }
  func.func @transform_6(%arg0: i32) -> (i32, i32) {
    %c0_i32 = arith.constant 0 : i32
    %c0_i32_0 = arith.constant 0 : i32
    %c0_i32_1 = arith.constant 0 : i32
    return %c0_i32, %c0_i32_0 : i32, i32
  }
  func.func @transform_7(%arg0: i32) -> (i32, i32) {
    %c0_i32 = arith.constant 0 : i32
    %c0_i32_0 = arith.constant 0 : i32
    return %arg0, %c0_i32 : i32, i32
  }
}

</mosaic_0001>

<llo_original>
// kernel: _classifier_forward_padded.1
$region0: #{_classifier_forward_padded.1}
  #allocation0 [shape = 'u32[]', space=smem, size = 0x4, offset = 0x4, fixed_abs, tag = 'smem constant byte address 0x4 - core index']
  #allocation1 [shape = 'u32[144,128]{1,0:T(1,128)}', space=vmem, size = 0x12000, scoped, tag = 'internal scratch']
  %s0 = inlined_call_operand.vmem [shape: f32[8,1024], index: 0, kind: input, shape index: {}]
  %s1 = inlined_call_operand.hbm [shape: bf16[1024,128], index: 1, kind: input, shape index: {}]
  %s2 = inlined_call_operand.vmem [shape: f32[1,128], index: 2, kind: input, shape index: {}]
  %s3 = inlined_call_operand.vmem [shape: bf16[128,128], index: 3, kind: input, shape index: {}]
  %s4 = inlined_call_operand.vmem [shape: f32[1,128], index: 4, kind: input, shape index: {}]
  %s5 = inlined_call_operand.vmem [shape: bf16[128,128], index: 5, kind: input, shape index: {}]
  %s6 = inlined_call_operand.vmem [shape: f32[1,128], index: 6, kind: input, shape index: {}]
  %s7 = inlined_call_operand.vmem [shape: f32[8,128], index: 7, kind: output, shape index: {}]
  %s8 = sld [smem:[#allocation0]]
  $region42: #{_classifier_forward_padded.1} parent=0
    _
  %s10 = ssub.s32 1, %s8
  %s11 = scalar_select 0, %s10, %s8
  $region1: #{_classifier_forward_padded.1} parent=0
    #allocation2 [shape = 'u8[262144]{0}', space=vmem, size = 0x40000, scoped, tag = 'input window, operand 1, single buffered']
    #allocation3 [shape = 's32[1]{0}', space=sflag, size = 0x4, scoped, tag = 'scoped memory for _classifier_forward_padded.1']
    %12 = vsyncpa [#allocation3], 0
    // Predicated region
    $region2: #{_classifier_forward_padded.1} parent=1 // pred_check
      _
    $region3: #{_classifier_forward_padded.1} parent=1 // pred_check_branch
      %14 = sbr.rel (0) target = $region5
    $region4: #{_classifier_forward_padded.1} parent=1 // pred_region
      _
    $region5: #{_classifier_forward_padded.1} parent=1 // pred_fallthru
      _
    // Predicated region
    $region6: #{_classifier_forward_padded.1} parent=1 // pred_check
      _
    $region7: #{_classifier_forward_padded.1} parent=1 // pred_check_branch
      %16 = sbr.rel (0) target = $region9
    $region8: #{_classifier_forward_padded.1} parent=1 // pred_region
      %s18 = ssub.s32 8192, 8192
      %19 = vsyncadd [#allocation3], %s18
      %s20 = sshll.u32 [#allocation2], 4
      %s21 = int_to_ptr.vmem [resolvable:$true] %s20
      %26 = dma.hbm_to_vmem [thread:$0]  %s1, 8192, %s21, [#allocation3], 64, 64, 4
    $region9: #{_classifier_forward_padded.1} parent=1 // pred_fallthru
      _
    // Predicated region
    $region10: #{_classifier_forward_padded.1} parent=1 // pred_check
      _
    $region11: #{_classifier_forward_padded.1} parent=1 // pred_check_branch
      %28 = sbr.rel (0) target = $region13
    $region12: #{_classifier_forward_padded.1} parent=1 // pred_region
      _
    $region13: #{_classifier_forward_padded.1} parent=1 // pred_fallthru
      _
    // Predicated region
    $region14: #{_classifier_forward_padded.1} parent=1 // pred_check
      _
    $region15: #{_classifier_forward_padded.1} parent=1 // pred_check_branch
      %30 = sbr.rel (0) target = $region17
    $region16: #{_classifier_forward_padded.1} parent=1 // pred_region
      _
    $region17: #{_classifier_forward_padded.1} parent=1 // pred_fallthru
      _
    // Predicated region
    $region18: #{_classifier_forward_padded.1} parent=1 // pred_check
      _
    $region19: #{_classifier_forward_padded.1} parent=1 // pred_check_branch
      %32 = sbr.rel (0) target = $region21
    $region20: #{_classifier_forward_padded.1} parent=1 // pred_region
      _
    $region21: #{_classifier_forward_padded.1} parent=1 // pred_fallthru
      _
    // Predicated region
    $region22: #{_classifier_forward_padded.1} parent=1 // pred_check
      _
    $region23: #{_classifier_forward_padded.1} parent=1 // pred_check_branch
      %34 = sbr.rel (0) target = $region25
    $region24: #{_classifier_forward_padded.1} parent=1 // pred_region
      _
    $region25: #{_classifier_forward_padded.1} parent=1 // pred_fallthru
      _
    // Predicated region
    $region26: #{_classifier_forward_padded.1} parent=1 // pred_check
      _
    $region27: #{_classifier_forward_padded.1} parent=1 // pred_check_branch
      %36 = sbr.rel (0) target = $region29
    $region28: #{_classifier_forward_padded.1} parent=1 // pred_region
      _
    $region29: #{_classifier_forward_padded.1} parent=1 // pred_fallthru
      _
    // Predicated region
    $region30: #{_classifier_forward_padded.1} parent=1 // pred_check
      _
    $region31: #{_classifier_forward_padded.1} parent=1 // pred_check_branch
      %38 = sbr.rel (0) target = $region33
    $region32: #{_classifier_forward_padded.1} parent=1 // pred_region
      %39 = dma.done [#allocation3], 8192
    $region33: #{_classifier_forward_padded.1} parent=1 // pred_fallthru
      _
    %v41 = vld [vmem:[%s0] sm:$0xff]
    %v42 = vld [vmem:[%s0 + $0x8] sm:$0xff]
    %v43 = vld [vmem:[%s0 + $0x10] sm:$0xff]
    %v44 = vld [vmem:[%s0 + $0x18] sm:$0xff]
    %v45 = vld [vmem:[%s0 + $0x20] sm:$0xff]
    %v46 = vld [vmem:[%s0 + $0x28] sm:$0xff]
    %v47 = vld [vmem:[%s0 + $0x30] sm:$0xff]
    %v48 = vld [vmem:[%s0 + $0x38] sm:$0xff]
    %v49 = vpack.c.bf16 %v41, %v41
    %v50 = vpack.c.bf16 %v42, %v42
    %v51 = vpack.c.bf16 %v43, %v43
    %v52 = vpack.c.bf16 %v44, %v44
    %v53 = vpack.c.bf16 %v45, %v45
    %v54 = vpack.c.bf16 %v46, %v46
    %v55 = vpack.c.bf16 %v47, %v47
    %v56 = vpack.c.bf16 %v48, %v48
    %v57 = vld [vmem:[#allocation2] sm:$0xf]
    %v58 = vld [vmem:[#allocation2 + $0x4] sm:$0xf]
    %v59 = vld [vmem:[#allocation2 + $0x8] sm:$0xf]
    %v60 = vld [vmem:[#allocation2 + $0xc] sm:$0xf]
    %v61 = vld [vmem:[#allocation2 + $0x10] sm:$0xf]
    %v62 = vld [vmem:[#allocation2 + $0x14] sm:$0xf]
    %v63 = vld [vmem:[#allocation2 + $0x18] sm:$0xf]
    %v64 = vld [vmem:[#allocation2 + $0x1c] sm:$0xf]
    %v65 = vld [vmem:[#allocation2 + $0x20] sm:$0xf]
    %v66 = vld [vmem:[#allocation2 + $0x24] sm:$0xf]
    %v67 = vld [vmem:[#allocation2 + $0x28] sm:$0xf]
    %v68 = vld [vmem:[#allocation2 + $0x2c] sm:$0xf]
    %v69 = vld [vmem:[#allocation2 + $0x30] sm:$0xf]
    %v70 = vld [vmem:[#allocation2 + $0x34] sm:$0xf]
    %v71 = vld [vmem:[#allocation2 + $0x38] sm:$0xf]
    %v72 = vld [vmem:[#allocation2 + $0x3c] sm:$0xf]
    %v73 = vld [vmem:[#allocation2 + $0x40] sm:$0xf]
    %v74 = vld [vmem:[#allocation2 + $0x44] sm:$0xf]
    %v75 = vld [vmem:[#allocation2 + $0x48] sm:$0xf]
    %v76 = vld [vmem:[#allocation2 + $0x4c] sm:$0xf]
    %v77 = vld [vmem:[#allocation2 + $0x50] sm:$0xf]
    %v78 = vld [vmem:[#allocation2 + $0x54] sm:$0xf]
    %v79 = vld [vmem:[#allocation2 + $0x58] sm:$0xf]
    %v80 = vld [vmem:[#allocation2 + $0x5c] sm:$0xf]
    %v81 = vld [vmem:[#allocation2 + $0x60] sm:$0xf]
    %v82 = vld [vmem:[#allocation2 + $0x64] sm:$0xf]
    %v83 = vld [vmem:[#allocation2 + $0x68] sm:$0xf]
    %v84 = vld [vmem:[#allocation2 + $0x6c] sm:$0xf]
    %v85 = vld [vmem:[#allocation2 + $0x70] sm:$0xf]
    %v86 = vld [vmem:[#allocation2 + $0x74] sm:$0xf]
    %v87 = vld [vmem:[#allocation2 + $0x78] sm:$0xf]
    %v88 = vld [vmem:[#allocation2 + $0x7c] sm:$0xf]
    %v89 = vld [vmem:[#allocation2 + $0x80] sm:$0xf]
    %v90 = vld [vmem:[#allocation2 + $0x84] sm:$0xf]
    %v91 = vld [vmem:[#allocation2 + $0x88] sm:$0xf]
    %v92 = vld [vmem:[#allocation2 + $0x8c] sm:$0xf]
    %v93 = vld [vmem:[#allocation2 + $0x90] sm:$0xf]
    %v94 = vld [vmem:[#allocation2 + $0x94] sm:$0xf]
    %v95 = vld [vmem:[#allocation2 + $0x98] sm:$0xf]
    %v96 = vld [vmem:[#allocation2 + $0x9c] sm:$0xf]
    %v97 = vld [vmem:[#allocation2 + $0xa0] sm:$0xf]
    %v98 = vld [vmem:[#allocation2 + $0xa4] sm:$0xf]
    %v99 = vld [vmem:[#allocation2 + $0xa8] sm:$0xf]
    %v100 = vld [vmem:[#allocation2 + $0xac] sm:$0xf]
    %v101 = vld [vmem:[#allocation2 + $0xb0] sm:$0xf]
    %v102 = vld [vmem:[#allocation2 + $0xb4] sm:$0xf]
    %v103 = vld [vmem:[#allocation2 + $0xb8] sm:$0xf]
    %v104 = vld [vmem:[#allocation2 + $0xbc] sm:$0xf]
    %v105 = vld [vmem:[#allocation2 + $0xc0] sm:$0xf]
    %v106 = vld [vmem:[#allocation2 + $0xc4] sm:$0xf]
    %v107 = vld [vmem:[#allocation2 + $0xc8] sm:$0xf]
    %v108 = vld [vmem:[#allocation2 + $0xcc] sm:$0xf]
    %v109 = vld [vmem:[#allocation2 + $0xd0] sm:$0xf]
    %v110 = vld [vmem:[#allocation2 + $0xd4] sm:$0xf]
    %v111 = vld [vmem:[#allocation2 + $0xd8] sm:$0xf]
    %v112 = vld [vmem:[#allocation2 + $0xdc] sm:$0xf]
    %v113 = vld [vmem:[#allocation2 + $0xe0] sm:$0xf]
    %v114 = vld [vmem:[#allocation2 + $0xe4] sm:$0xf]
    %v115 = vld [vmem:[#allocation2 + $0xe8] sm:$0xf]
    %v116 = vld [vmem:[#allocation2 + $0xec] sm:$0xf]
    %v117 = vld [vmem:[#allocation2 + $0xf0] sm:$0xf]
    %v118 = vld [vmem:[#allocation2 + $0xf4] sm:$0xf]
    %v119 = vld [vmem:[#allocation2 + $0xf8] sm:$0xf]
    %v120 = vld [vmem:[#allocation2 + $0xfc] sm:$0xf]
    %v121 = vld [vmem:[#allocation2 + $0x100] sm:$0xf]
    %v122 = vld [vmem:[#allocation2 + $0x104] sm:$0xf]
    %v123 = vld [vmem:[#allocation2 + $0x108] sm:$0xf]
    %v124 = vld [vmem:[#allocation2 + $0x10c] sm:$0xf]
    %v125 = vld [vmem:[#allocation2 + $0x110] sm:$0xf]
    %v126 = vld [vmem:[#allocation2 + $0x114] sm:$0xf]
    %v127 = vld [vmem:[#allocation2 + $0x118] sm:$0xf]
    %v128 = vld [vmem:[#allocation2 + $0x11c] sm:$0xf]
    %v129 = vld [vmem:[#allocation2 + $0x120] sm:$0xf]
    %v130 = vld [vmem:[#allocation2 + $0x124] sm:$0xf]
    %v131 = vld [vmem:[#allocation2 + $0x128] sm:$0xf]
    %v132 = vld [vmem:[#allocation2 + $0x12c] sm:$0xf]
    %v133 = vld [vmem:[#allocation2 + $0x130] sm:$0xf]
    %v134 = vld [vmem:[#allocation2 + $0x134] sm:$0xf]
    %v135 = vld [vmem:[#allocation2 + $0x138] sm:$0xf]
    %v136 = vld [vmem:[#allocation2 + $0x13c] sm:$0xf]
    %v137 = vld [vmem:[#allocation2 + $0x140] sm:$0xf]
    %v138 = vld [vmem:[#allocation2 + $0x144] sm:$0xf]
    %v139 = vld [vmem:[#allocation2 + $0x148] sm:$0xf]
    %v140 = vld [vmem:[#allocation2 + $0x14c] sm:$0xf]
    %v141 = vld [vmem:[#allocation2 + $0x150] sm:$0xf]
    %v142 = vld [vmem:[#allocation2 + $0x154] sm:$0xf]
    %v143 = vld [vmem:[#allocation2 + $0x158] sm:$0xf]
    %v144 = vld [vmem:[#allocation2 + $0x15c] sm:$0xf]
    %v145 = vld [vmem:[#allocation2 + $0x160] sm:$0xf]
    %v146 = vld [vmem:[#allocation2 + $0x164] sm:$0xf]
    %v147 = vld [vmem:[#allocation2 + $0x168] sm:$0xf]
    %v148 = vld [vmem:[#allocation2 + $0x16c] sm:$0xf]
    %v149 = vld [vmem:[#allocation2 + $0x170] sm:$0xf]
    %v150 = vld [vmem:[#allocation2 + $0x174] sm:$0xf]
    %v151 = vld [vmem:[#allocation2 + $0x178] sm:$0xf]
    %v152 = vld [vmem:[#allocation2 + $0x17c] sm:$0xf]
    %v153 = vld [vmem:[#allocation2 + $0x180] sm:$0xf]
    %v154 = vld [vmem:[#allocation2 + $0x184] sm:$0xf]
    %v155 = vld [vmem:[#allocation2 + $0x188] sm:$0xf]
    %v156 = vld [vmem:[#allocation2 + $0x18c] sm:$0xf]
    %v157 = vld [vmem:[#allocation2 + $0x190] sm:$0xf]
    %v158 = vld [vmem:[#allocation2 + $0x194] sm:$0xf]
    %v159 = vld [vmem:[#allocation2 + $0x198] sm:$0xf]
    %v160 = vld [vmem:[#allocation2 + $0x19c] sm:$0xf]
    %v161 = vld [vmem:[#allocation2 + $0x1a0] sm:$0xf]
    %v162 = vld [vmem:[#allocation2 + $0x1a4] sm:$0xf]
    %v163 = vld [vmem:[#allocation2 + $0x1a8] sm:$0xf]
    %v164 = vld [vmem:[#allocation2 + $0x1ac] sm:$0xf]
    %v165 = vld [vmem:[#allocation2 + $0x1b0] sm:$0xf]
    %v166 = vld [vmem:[#allocation2 + $0x1b4] sm:$0xf]
    %v167 = vld [vmem:[#allocation2 + $0x1b8] sm:$0xf]
    %v168 = vld [vmem:[#allocation2 + $0x1bc] sm:$0xf]
    %v169 = vld [vmem:[#allocation2 + $0x1c0] sm:$0xf]
    %v170 = vld [vmem:[#allocation2 + $0x1c4] sm:$0xf]
    %v171 = vld [vmem:[#allocation2 + $0x1c8] sm:$0xf]
    %v172 = vld [vmem:[#allocation2 + $0x1cc] sm:$0xf]
    %v173 = vld [vmem:[#allocation2 + $0x1d0] sm:$0xf]
    %v174 = vld [vmem:[#allocation2 + $0x1d4] sm:$0xf]
    %v175 = vld [vmem:[#allocation2 + $0x1d8] sm:$0xf]
    %v176 = vld [vmem:[#allocation2 + $0x1dc] sm:$0xf]
    %v177 = vld [vmem:[#allocation2 + $0x1e0] sm:$0xf]
    %v178 = vld [vmem:[#allocation2 + $0x1e4] sm:$0xf]
    %v179 = vld [vmem:[#allocation2 + $0x1e8] sm:$0xf]
    %v180 = vld [vmem:[#allocation2 + $0x1ec] sm:$0xf]
    %v181 = vld [vmem:[#allocation2 + $0x1f0] sm:$0xf]
    %v182 = vld [vmem:[#allocation2 + $0x1f4] sm:$0xf]
    %v183 = vld [vmem:[#allocation2 + $0x1f8] sm:$0xf]
    %v184 = vld [vmem:[#allocation2 + $0x1fc] sm:$0xf]
    %v185 = vld [vmem:[%s2] sm:$0x1]
    %v187 = vlaneseq
    %v188 = vshrl.u32 %v187, 7
    %v189 = vsub.s32 0, %v188
    %v190 = vrot.slane %v185, %v189
    %v320 = vunpack.c.l.b16 %v57
    %v321 = vunpack.c.l.b16 %v58
    %v322 = vunpack.c.l.b16 %v59
    %v323 = vunpack.c.l.b16 %v60
    %v324 = vunpack.c.l.b16 %v61
    %v325 = vunpack.c.l.b16 %v62
    %v326 = vunpack.c.l.b16 %v63
    %v327 = vunpack.c.l.b16 %v64
    %v328 = vunpack.c.l.b16 %v65
    %v329 = vunpack.c.l.b16 %v66
    %v330 = vunpack.c.l.b16 %v67
    %v331 = vunpack.c.l.b16 %v68
    %v332 = vunpack.c.l.b16 %v69
    %v333 = vunpack.c.l.b16 %v70
    %v334 = vunpack.c.l.b16 %v71
    %v335 = vunpack.c.l.b16 %v72
    %v336 = vunpack.c.l.b16 %v73
    %v337 = vunpack.c.l.b16 %v74
    %v338 = vunpack.c.l.b16 %v75
    %v339 = vunpack.c.l.b16 %v76
    %v340 = vunpack.c.l.b16 %v77
    %v341 = vunpack.c.l.b16 %v78
    %v342 = vunpack.c.l.b16 %v79
    %v343 = vunpack.c.l.b16 %v80
    %v344 = vunpack.c.l.b16 %v81
    %v345 = vunpack.c.l.b16 %v82
    %v346 = vunpack.c.l.b16 %v83
    %v347 = vunpack.c.l.b16 %v84
    %v348 = vunpack.c.l.b16 %v85
    %v349 = vunpack.c.l.b16 %v86
    %v350 = vunpack.c.l.b16 %v87
    %v351 = vunpack.c.l.b16 %v88
    %v352 = vunpack.c.l.b16 %v89
    %v353 = vunpack.c.l.b16 %v90
    %v354 = vunpack.c.l.b16 %v91
    %v355 = vunpack.c.l.b16 %v92
    %v356 = vunpack.c.l.b16 %v93
    %v357 = vunpack.c.l.b16 %v94
    %v358 = vunpack.c.l.b16 %v95
    %v359 = vunpack.c.l.b16 %v96
    %v360 = vunpack.c.l.b16 %v97
    %v361 = vunpack.c.l.b16 %v98
    %v362 = vunpack.c.l.b16 %v99
    %v363 = vunpack.c.l.b16 %v100
    %v364 = vunpack.c.l.b16 %v101
    %v365 = vunpack.c.l.b16 %v102
    %v366 = vunpack.c.l.b16 %v103
    %v367 = vunpack.c.l.b16 %v104
    %v368 = vunpack.c.l.b16 %v105
    %v369 = vunpack.c.l.b16 %v106
    %v370 = vunpack.c.l.b16 %v107
    %v371 = vunpack.c.l.b16 %v108
    %v372 = vunpack.c.l.b16 %v109
    %v373 = vunpack.c.l.b16 %v110
    %v374 = vunpack.c.l.b16 %v111
    %v375 = vunpack.c.l.b16 %v112
    %v376 = vunpack.c.l.b16 %v113
    %v377 = vunpack.c.l.b16 %v114
    %v378 = vunpack.c.l.b16 %v115
    %v379 = vunpack.c.l.b16 %v116
    %v380 = vunpack.c.l.b16 %v117
    %v381 = vunpack.c.l.b16 %v118
    %v382 = vunpack.c.l.b16 %v119
    %v383 = vunpack.c.l.b16 %v120
    %v384 = vunpack.c.l.b16 %v121
    %v385 = vunpack.c.l.b16 %v122
    %v386 = vunpack.c.l.b16 %v123
    %v387 = vunpack.c.l.b16 %v124
    %v388 = vunpack.c.l.b16 %v125
    %v389 = vunpack.c.l.b16 %v126
    %v390 = vunpack.c.l.b16 %v127
    %v391 = vunpack.c.l.b16 %v128
    %v392 = vunpack.c.l.b16 %v129
    %v393 = vunpack.c.l.b16 %v130
    %v394 = vunpack.c.l.b16 %v131
    %v395 = vunpack.c.l.b16 %v132
    %v396 = vunpack.c.l.b16 %v133
    %v397 = vunpack.c.l.b16 %v134
    %v398 = vunpack.c.l.b16 %v135
    %v399 = vunpack.c.l.b16 %v136
    %v400 = vunpack.c.l.b16 %v137
    %v401 = vunpack.c.l.b16 %v138
    %v402 = vunpack.c.l.b16 %v139
    %v403 = vunpack.c.l.b16 %v140
    %v404 = vunpack.c.l.b16 %v141
    %v405 = vunpack.c.l.b16 %v142
    %v406 = vunpack.c.l.b16 %v143
    %v407 = vunpack.c.l.b16 %v144
    %v408 = vunpack.c.l.b16 %v145
    %v409 = vunpack.c.l.b16 %v146
    %v410 = vunpack.c.l.b16 %v147
    %v411 = vunpack.c.l.b16 %v148
    %v412 = vunpack.c.l.b16 %v149
    %v413 = vunpack.c.l.b16 %v150
    %v414 = vunpack.c.l.b16 %v151
    %v415 = vunpack.c.l.b16 %v152
    %v416 = vunpack.c.l.b16 %v153
    %v417 = vunpack.c.l.b16 %v154
    %v418 = vunpack.c.l.b16 %v155
    %v419 = vunpack.c.l.b16 %v156
    %v420 = vunpack.c.l.b16 %v157
    %v421 = vunpack.c.l.b16 %v158
    %v422 = vunpack.c.l.b16 %v159
    %v423 = vunpack.c.l.b16 %v160
    %v424 = vunpack.c.l.b16 %v161
    %v425 = vunpack.c.l.b16 %v162
    %v426 = vunpack.c.l.b16 %v163
    %v427 = vunpack.c.l.b16 %v164
    %v428 = vunpack.c.l.b16 %v165
    %v429 = vunpack.c.l.b16 %v166
    %v430 = vunpack.c.l.b16 %v167
    %v431 = vunpack.c.l.b16 %v168
    %v432 = vunpack.c.l.b16 %v169
    %v433 = vunpack.c.l.b16 %v170
    %v434 = vunpack.c.l.b16 %v171
    %v435 = vunpack.c.l.b16 %v172
    %v436 = vunpack.c.l.b16 %v173
    %v437 = vunpack.c.l.b16 %v174
    %v438 = vunpack.c.l.b16 %v175
    %v439 = vunpack.c.l.b16 %v176
    %v440 = vunpack.c.l.b16 %v177
    %v441 = vunpack.c.l.b16 %v178
    %v442 = vunpack.c.l.b16 %v179
    %v443 = vunpack.c.l.b16 %v180
    %v444 = vunpack.c.l.b16 %v181
    %v445 = vunpack.c.l.b16 %v182
    %v446 = vunpack.c.l.b16 %v183
    %v447 = vunpack.c.l.b16 %v184
    %v448 = vpack.c.b16 %v321, %v320
    %v449 = vpack.c.b16 %v323, %v322
    %v450 = vpack.c.b16 %v325, %v324
    %v451 = vpack.c.b16 %v327, %v326
    %v452 = vpack.c.b16 %v329, %v328
    %v453 = vpack.c.b16 %v331, %v330
    %v454 = vpack.c.b16 %v333, %v332
    %v455 = vpack.c.b16 %v335, %v334
    %v456 = vpack.c.b16 %v337, %v336
    %v457 = vpack.c.b16 %v339, %v338
    %v458 = vpack.c.b16 %v341, %v340
    %v459 = vpack.c.b16 %v343, %v342
    %v460 = vpack.c.b16 %v345, %v344
    %v461 = vpack.c.b16 %v347, %v346
    %v462 = vpack.c.b16 %v349, %v348
    %v463 = vpack.c.b16 %v351, %v350
    %v464 = vpack.c.b16 %v353, %v352
    %v465 = vpack.c.b16 %v355, %v354
    %v466 = vpack.c.b16 %v357, %v356
    %v467 = vpack.c.b16 %v359, %v358
    %v468 = vpack.c.b16 %v361, %v360
    %v469 = vpack.c.b16 %v363, %v362
    %v470 = vpack.c.b16 %v365, %v364
    %v471 = vpack.c.b16 %v367, %v366
    %v472 = vpack.c.b16 %v369, %v368
    %v473 = vpack.c.b16 %v371, %v370
    %v474 = vpack.c.b16 %v373, %v372
    %v475 = vpack.c.b16 %v375, %v374
    %v476 = vpack.c.b16 %v377, %v376
    %v477 = vpack.c.b16 %v379, %v378
    %v478 = vpack.c.b16 %v381, %v380
    %v479 = vpack.c.b16 %v383, %v382
    %v480 = vpack.c.b16 %v385, %v384
    %v481 = vpack.c.b16 %v387, %v386
    %v482 = vpack.c.b16 %v389, %v388
    %v483 = vpack.c.b16 %v391, %v390
    %v484 = vpack.c.b16 %v393, %v392
    %v485 = vpack.c.b16 %v395, %v394
    %v486 = vpack.c.b16 %v397, %v396
    %v487 = vpack.c.b16 %v399, %v398
    %v488 = vpack.c.b16 %v401, %v400
    %v489 = vpack.c.b16 %v403, %v402
    %v490 = vpack.c.b16 %v405, %v404
    %v491 = vpack.c.b16 %v407, %v406
    %v492 = vpack.c.b16 %v409, %v408
    %v493 = vpack.c.b16 %v411, %v410
    %v494 = vpack.c.b16 %v413, %v412
    %v495 = vpack.c.b16 %v415, %v414
    %v496 = vpack.c.b16 %v417, %v416
    %v497 = vpack.c.b16 %v419, %v418
    %v498 = vpack.c.b16 %v421, %v420
    %v499 = vpack.c.b16 %v423, %v422
    %v500 = vpack.c.b16 %v425, %v424
    %v501 = vpack.c.b16 %v427, %v426
    %v502 = vpack.c.b16 %v429, %v428
    %v503 = vpack.c.b16 %v431, %v430
    %v504 = vpack.c.b16 %v433, %v432
    %v505 = vpack.c.b16 %v435, %v434
    %v506 = vpack.c.b16 %v437, %v436
    %v507 = vpack.c.b16 %v439, %v438
    %v508 = vpack.c.b16 %v441, %v440
    %v509 = vpack.c.b16 %v443, %v442
    %v510 = vpack.c.b16 %v445, %v444
    %v511 = vpack.c.b16 %v447, %v446
    %576 = vmatprep.subr.bf16.mxu0 0
    %577 = vmatpush1.bf16.msra.mxu0 %v448
    %578 = vmatprep.subr.bf16.mxu0 0
    %579 = vmatpush1.bf16.msra.mxu0 %v449
    %580 = vmatprep.subr.bf16.mxu0 0
    %581 = vmatpush1.bf16.msra.mxu0 %v450
    %582 = vmatprep.subr.bf16.mxu0 0
    %583 = vmatpush1.bf16.msra.mxu0 %v451
    %584 = vmatprep.subr.bf16.mxu0 0
    %585 = vmatpush1.bf16.msra.mxu0 %v452
    %586 = vmatprep.subr.bf16.mxu0 0
    %587 = vmatpush1.bf16.msra.mxu0 %v453
    %588 = vmatprep.subr.bf16.mxu0 0
    %589 = vmatpush1.bf16.msra.mxu0 %v454
    %590 = vmatprep.subr.bf16.mxu0 0
    %591 = vmatpush1.bf16.msra.mxu0 %v455
    %592 = vmatprep.subr.bf16.mxu0 0
    %593 = vmatpush1.bf16.msra.mxu0 %v456
    %594 = vmatprep.subr.bf16.mxu0 0
    %595 = vmatpush1.bf16.msra.mxu0 %v457
    %596 = vmatprep.subr.bf16.mxu0 0
    %597 = vmatpush1.bf16.msra.mxu0 %v458
    %598 = vmatprep.subr.bf16.mxu0 0
    %599 = vmatpush1.bf16.msra.mxu0 %v459
    %600 = vmatprep.subr.bf16.mxu0 0
    %601 = vmatpush1.bf16.msra.mxu0 %v460
    %602 = vmatprep.subr.bf16.mxu0 0
    %603 = vmatpush1.bf16.msra.mxu0 %v461
    %604 = vmatprep.subr.bf16.mxu0 0
    %605 = vmatpush1.bf16.msra.mxu0 %v462
    %606 = vmatprep.subr.bf16.mxu0 0
    %607 = vmatpush1.bf16.msra.mxu0 %v463
    %608 = vmatprep.mubr.bf16.mxu0 %v50
    %609 = vmatmul.mubr.bf16.gmra.mrb[0].mxu0 %v49
    %v610 = vpop.f32.mrb[0].mxu0
    %v611 = vadd.f32 %v190, %v610
    %v612 = vpop.f32.mrb[0].mxu0
    %v613 = vpop.f32.mrb[0].mxu0
    %v614 = vpop.f32.mrb[0].mxu0
    %615 = vdwg.mxu0
    %616 = vmatprep.subr.bf16.mxu0 0
    %617 = vmatpush1.bf16.msra.mxu0 %v464
    %618 = vmatprep.subr.bf16.mxu0 0
    %619 = vmatpush1.bf16.msra.mxu0 %v465
    %620 = vmatprep.subr.bf16.mxu0 0
    %621 = vmatpush1.bf16.msra.mxu0 %v466
    %622 = vmatprep.subr.bf16.mxu0 0
    %623 = vmatpush1.bf16.msra.mxu0 %v467
    %624 = vmatprep.subr.bf16.mxu0 0
    %625 = vmatpush1.bf16.msra.mxu0 %v468
    %626 = vmatprep.subr.bf16.mxu0 0
    %627 = vmatpush1.bf16.msra.mxu0 %v469
    %628 = vmatprep.subr.bf16.mxu0 0
    %629 = vmatpush1.bf16.msra.mxu0 %v470
    %630 = vmatprep.subr.bf16.mxu0 0
    %631 = vmatpush1.bf16.msra.mxu0 %v471
    %632 = vmatprep.subr.bf16.mxu0 0
    %633 = vmatpush1.bf16.msra.mxu0 %v472
    %634 = vmatprep.subr.bf16.mxu0 0
    %635 = vmatpush1.bf16.msra.mxu0 %v473
    %636 = vmatprep.subr.bf16.mxu0 0
    %637 = vmatpush1.bf16.msra.mxu0 %v474
    %638 = vmatprep.subr.bf16.mxu0 0
    %639 = vmatpush1.bf16.msra.mxu0 %v475
    %640 = vmatprep.subr.bf16.mxu0 0
    %641 = vmatpush1.bf16.msra.mxu0 %v476
    %642 = vmatprep.subr.bf16.mxu0 0
    %643 = vmatpush1.bf16.msra.mxu0 %v477
    %644 = vmatprep.subr.bf16.mxu0 0
    %645 = vmatpush1.bf16.msra.mxu0 %v478
    %646 = vmatprep.subr.bf16.mxu0 0
    %647 = vmatpush1.bf16.msra.mxu0 %v479
    %648 = vmatprep.mubr.bf16.mxu0 %v52
    %649 = vmatmul.mubr.bf16.gmra.mrb[0].mxu0 %v51
    %v650 = vpop.f32.mrb[0].mxu0
    %v651 = vadd.f32 %v611, %v650
    %v652 = vpop.f32.mrb[0].mxu0
    %v653 = vpop.f32.mrb[0].mxu0
    %v654 = vpop.f32.mrb[0].mxu0
    %655 = vdwg.mxu0
    %656 = vmatprep.subr.bf16.mxu0 0
    %657 = vmatpush1.bf16.msra.mxu0 %v480
    %658 = vmatprep.subr.bf16.mxu0 0
    %659 = vmatpush1.bf16.msra.mxu0 %v481
    %660 = vmatprep.subr.bf16.mxu0 0
    %661 = vmatpush1.bf16.msra.mxu0 %v482
    %662 = vmatprep.subr.bf16.mxu0 0
    %663 = vmatpush1.bf16.msra.mxu0 %v483
    %664 = vmatprep.subr.bf16.mxu0 0
    %665 = vmatpush1.bf16.msra.mxu0 %v484
    %666 = vmatprep.subr.bf16.mxu0 0
    %667 = vmatpush1.bf16.msra.mxu0 %v485
    %668 = vmatprep.subr.bf16.mxu0 0
    %669 = vmatpush1.bf16.msra.mxu0 %v486
    %670 = vmatprep.subr.bf16.mxu0 0
    %671 = vmatpush1.bf16.msra.mxu0 %v487
    %672 = vmatprep.subr.bf16.mxu0 0
    %673 = vmatpush1.bf16.msra.mxu0 %v488
    %674 = vmatprep.subr.bf16.mxu0 0
    %675 = vmatpush1.bf16.msra.mxu0 %v489
    %676 = vmatprep.subr.bf16.mxu0 0
    %677 = vmatpush1.bf16.msra.mxu0 %v490
    %678 = vmatprep.subr.bf16.mxu0 0
    %679 = vmatpush1.bf16.msra.mxu0 %v491
    %680 = vmatprep.subr.bf16.mxu0 0
    %681 = vmatpush1.bf16.msra.mxu0 %v492
    %682 = vmatprep.subr.bf16.mxu0 0
    %683 = vmatpush1.bf16.msra.mxu0 %v493
    %684 = vmatprep.subr.bf16.mxu0 0
    %685 = vmatpush1.bf16.msra.mxu0 %v494
    %686 = vmatprep.subr.bf16.mxu0 0
    %687 = vmatpush1.bf16.msra.mxu0 %v495
    %688 = vmatprep.mubr.bf16.mxu0 %v54
    %689 = vmatmul.mubr.bf16.gmra.mrb[0].mxu0 %v53
    %v690 = vpop.f32.mrb[0].mxu0
    %v691 = vadd.f32 %v651, %v690
    %v692 = vpop.f32.mrb[0].mxu0
    %v693 = vpop.f32.mrb[0].mxu0
    %v694 = vpop.f32.mrb[0].mxu0
    %695 = vdwg.mxu0
    %696 = vmatprep.subr.bf16.mxu0 0
    %697 = vmatpush1.bf16.msra.mxu0 %v496
    %698 = vmatprep.subr.bf16.mxu0 0
    %699 = vmatpush1.bf16.msra.mxu0 %v497
    %700 = vmatprep.subr.bf16.mxu0 0
    %701 = vmatpush1.bf16.msra.mxu0 %v498
    %702 = vmatprep.subr.bf16.mxu0 0
    %703 = vmatpush1.bf16.msra.mxu0 %v499
    %704 = vmatprep.subr.bf16.mxu0 0
    %705 = vmatpush1.bf16.msra.mxu0 %v500
    %706 = vmatprep.subr.bf16.mxu0 0
    %707 = vmatpush1.bf16.msra.mxu0 %v501
    %708 = vmatprep.subr.bf16.mxu0 0
    %709 = vmatpush1.bf16.msra.mxu0 %v502
    %710 = vmatprep.subr.bf16.mxu0 0
    %711 = vmatpush1.bf16.msra.mxu0 %v503
    %712 = vmatprep.subr.bf16.mxu0 0
    %713 = vmatpush1.bf16.msra.mxu0 %v504
    %714 = vmatprep.subr.bf16.mxu0 0
    %715 = vmatpush1.bf16.msra.mxu0 %v505
    %716 = vmatprep.subr.bf16.mxu0 0
    %717 = vmatpush1.bf16.msra.mxu0 %v506
    %718 = vmatprep.subr.bf16.mxu0 0
    %719 = vmatpush1.bf16.msra.mxu0 %v507
    %720 = vmatprep.subr.bf16.mxu0 0
    %721 = vmatpush1.bf16.msra.mxu0 %v508
    %722 = vmatprep.subr.bf16.mxu0 0
    %723 = vmatpush1.bf16.msra.mxu0 %v509
    %724 = vmatprep.subr.bf16.mxu0 0
    %725 = vmatpush1.bf16.msra.mxu0 %v510
    %726 = vmatprep.subr.bf16.mxu0 0
    %727 = vmatpush1.bf16.msra.mxu0 %v511
    %728 = vmatprep.mubr.bf16.mxu0 %v56
    %729 = vmatmul.mubr.bf16.gmra.mrb[0].mxu0 %v55
    %v730 = vpop.f32.mrb[0].mxu0
    %v731 = vadd.f32 %v691, %v730
    %v732 = vpop.f32.mrb[0].mxu0
    %v733 = vpop.f32.mrb[0].mxu0
    %v734 = vpop.f32.mrb[0].mxu0
    %735 = vdwg.mxu0
    %v736 = vmax.f32 %v731, 0.0
    %v737 = vpack.c.bf16 %v736, %v736
    %v738 = vld [vmem:[%s3] sm:$0xf]
    %v739 = vld [vmem:[%s3 + $0x4] sm:$0xf]
    %v740 = vld [vmem:[%s3 + $0x8] sm:$0xf]
    %v741 = vld [vmem:[%s3 + $0xc] sm:$0xf]
    %v742 = vld [vmem:[%s3 + $0x10] sm:$0xf]
    %v743 = vld [vmem:[%s3 + $0x14] sm:$0xf]
    %v744 = vld [vmem:[%s3 + $0x18] sm:$0xf]
    %v745 = vld [vmem:[%s3 + $0x1c] sm:$0xf]
    %v746 = vld [vmem:[%s3 + $0x20] sm:$0xf]
    %v747 = vld [vmem:[%s3 + $0x24] sm:$0xf]
    %v748 = vld [vmem:[%s3 + $0x28] sm:$0xf]
    %v749 = vld [vmem:[%s3 + $0x2c] sm:$0xf]
    %v750 = vld [vmem:[%s3 + $0x30] sm:$0xf]
    %v751 = vld [vmem:[%s3 + $0x34] sm:$0xf]
    %v752 = vld [vmem:[%s3 + $0x38] sm:$0xf]
    %v753 = vld [vmem:[%s3 + $0x3c] sm:$0xf]
    %v754 = vld [vmem:[%s4] sm:$0x1]
    %v756 = vlaneseq
    %v757 = vshrl.u32 %v756, 7
    %v758 = vsub.s32 0, %v757
    %v759 = vrot.slane %v754, %v758
    %v777 = vunpack.c.l.b16 %v738
    %v778 = vunpack.c.l.b16 %v739
    %v779 = vunpack.c.l.b16 %v740
    %v780 = vunpack.c.l.b16 %v741
    %v781 = vunpack.c.l.b16 %v742
    %v782 = vunpack.c.l.b16 %v743
    %v783 = vunpack.c.l.b16 %v744
    %v784 = vunpack.c.l.b16 %v745
    %v785 = vunpack.c.l.b16 %v746
    %v786 = vunpack.c.l.b16 %v747
    %v787 = vunpack.c.l.b16 %v748
    %v788 = vunpack.c.l.b16 %v749
    %v789 = vunpack.c.l.b16 %v750
    %v790 = vunpack.c.l.b16 %v751
    %v791 = vunpack.c.l.b16 %v752
    %v792 = vunpack.c.l.b16 %v753
    %v793 = vpack.c.b16 %v778, %v777
    %v794 = vpack.c.b16 %v780, %v779
    %v795 = vpack.c.b16 %v782, %v781
    %v796 = vpack.c.b16 %v784, %v783
    %v797 = vpack.c.b16 %v786, %v785
    %v798 = vpack.c.b16 %v788, %v787
    %v799 = vpack.c.b16 %v790, %v789
    %v800 = vpack.c.b16 %v792, %v791
    %809 = vmatprep.subr.bf16.mxu0 0
    %810 = vmatpush1.bf16.msra.mxu0 %v793
    %811 = vmatprep.subr.bf16.mxu0 0
    %812 = vmatpush1.bf16.msra.mxu0 %v794
    %813 = vmatprep.subr.bf16.mxu0 0
    %814 = vmatpush1.bf16.msra.mxu0 %v795
    %815 = vmatprep.subr.bf16.mxu0 0
    %816 = vmatpush1.bf16.msra.mxu0 %v796
    %817 = vmatprep.subr.bf16.mxu0 0
    %818 = vmatpush1.bf16.msra.mxu0 %v797
    %819 = vmatprep.subr.bf16.mxu0 0
    %820 = vmatpush1.bf16.msra.mxu0 %v798
    %821 = vmatprep.subr.bf16.mxu0 0
    %822 = vmatpush1.bf16.msra.mxu0 %v799
    %823 = vmatprep.subr.bf16.mxu0 0
    %824 = vmatpush1.bf16.msra.mxu0 %v800
    %825 = vmatprep.subr.bf16.mxu0 0
    %826 = vmatpush1.bf16.msra.mxu0 0
    %827 = vmatprep.subr.bf16.mxu0 0
    %828 = vmatpush1.bf16.msra.mxu0 0
    %829 = vmatprep.subr.bf16.mxu0 0
    %830 = vmatpush1.bf16.msra.mxu0 0
    %831 = vmatprep.subr.bf16.mxu0 0
    %832 = vmatpush1.bf16.msra.mxu0 0
    %833 = vmatprep.subr.bf16.mxu0 0
    %834 = vmatpush1.bf16.msra.mxu0 0
    %835 = vmatprep.subr.bf16.mxu0 0
    %836 = vmatpush1.bf16.msra.mxu0 0
    %837 = vmatprep.subr.bf16.mxu0 0
    %838 = vmatpush1.bf16.msra.mxu0 0
    %839 = vmatprep.subr.bf16.mxu0 0
    %840 = vmatpush1.bf16.msra.mxu0 0
    %841 = vmatprep.mubr.bf16.mxu0 0
    %842 = vmatmul.mubr.bf16.gmra.mrb[0].mxu0 %v737
    %v843 = vpop.f32.mrb[0].mxu0
    %v844 = vadd.f32 %v759, %v843
    %v845 = vpop.f32.mrb[0].mxu0
    %v846 = vpop.f32.mrb[0].mxu0
    %v847 = vpop.f32.mrb[0].mxu0
    %848 = vdwg.mxu0
    %v849 = vmax.f32 %v844, 0.0
    %v850 = vpack.c.bf16 %v849, %v849
    %v851 = vld [vmem:[%s5] sm:$0xf]
    %v852 = vld [vmem:[%s5 + $0x4] sm:$0xf]
    %v853 = vld [vmem:[%s5 + $0x8] sm:$0xf]
    %v854 = vld [vmem:[%s5 + $0xc] sm:$0xf]
    %v855 = vld [vmem:[%s5 + $0x10] sm:$0xf]
    %v856 = vld [vmem:[%s5 + $0x14] sm:$0xf]
    %v857 = vld [vmem:[%s5 + $0x18] sm:$0xf]
    %v858 = vld [vmem:[%s5 + $0x1c] sm:$0xf]
    %v859 = vld [vmem:[%s5 + $0x20] sm:$0xf]
    %v860 = vld [vmem:[%s5 + $0x24] sm:$0xf]
    %v861 = vld [vmem:[%s5 + $0x28] sm:$0xf]
    %v862 = vld [vmem:[%s5 + $0x2c] sm:$0xf]
    %v863 = vld [vmem:[%s5 + $0x30] sm:$0xf]
    %v864 = vld [vmem:[%s5 + $0x34] sm:$0xf]
    %v865 = vld [vmem:[%s5 + $0x38] sm:$0xf]
    %v866 = vld [vmem:[%s5 + $0x3c] sm:$0xf]
    %v867 = vld [vmem:[%s6] sm:$0x1]
    %v869 = vlaneseq
    %v870 = vshrl.u32 %v869, 7
    %v871 = vsub.s32 0, %v870
    %v872 = vrot.slane %v867, %v871
    %v890 = vunpack.c.l.b16 %v851
    %v891 = vunpack.c.l.b16 %v852
    %v892 = vunpack.c.l.b16 %v853
    %v893 = vunpack.c.l.b16 %v854
    %v894 = vunpack.c.l.b16 %v855
    %v895 = vunpack.c.l.b16 %v856
    %v896 = vunpack.c.l.b16 %v857
    %v897 = vunpack.c.l.b16 %v858
    %v898 = vunpack.c.l.b16 %v859
    %v899 = vunpack.c.l.b16 %v860
    %v900 = vunpack.c.l.b16 %v861
    %v901 = vunpack.c.l.b16 %v862
    %v902 = vunpack.c.l.b16 %v863
    %v903 = vunpack.c.l.b16 %v864
    %v904 = vunpack.c.l.b16 %v865
    %v905 = vunpack.c.l.b16 %v866
    %v906 = vpack.c.b16 %v891, %v890
    %v907 = vpack.c.b16 %v893, %v892
    %v908 = vpack.c.b16 %v895, %v894
    %v909 = vpack.c.b16 %v897, %v896
    %v910 = vpack.c.b16 %v899, %v898
    %v911 = vpack.c.b16 %v901, %v900
    %v912 = vpack.c.b16 %v903, %v902
    %v913 = vpack.c.b16 %v905, %v904
    %922 = vmatprep.subr.bf16.mxu0 0
    %923 = vmatpush1.bf16.msra.mxu0 %v906
    %924 = vmatprep.subr.bf16.mxu0 0
    %925 = vmatpush1.bf16.msra.mxu0 %v907
    %926 = vmatprep.subr.bf16.mxu0 0
    %927 = vmatpush1.bf16.msra.mxu0 %v908
    %928 = vmatprep.subr.bf16.mxu0 0
    %929 = vmatpush1.bf16.msra.mxu0 %v909
    %930 = vmatprep.subr.bf16.mxu0 0
    %931 = vmatpush1.bf16.msra.mxu0 %v910
    %932 = vmatprep.subr.bf16.mxu0 0
    %933 = vmatpush1.bf16.msra.mxu0 %v911
    %934 = vmatprep.subr.bf16.mxu0 0
    %935 = vmatpush1.bf16.msra.mxu0 %v912
    %936 = vmatprep.subr.bf16.mxu0 0
    %937 = vmatpush1.bf16.msra.mxu0 %v913
    %938 = vmatprep.subr.bf16.mxu0 0
    %939 = vmatpush1.bf16.msra.mxu0 0
    %940 = vmatprep.subr.bf16.mxu0 0
    %941 = vmatpush1.bf16.msra.mxu0 0
    %942 = vmatprep.subr.bf16.mxu0 0
    %943 = vmatpush1.bf16.msra.mxu0 0
    %944 = vmatprep.subr.bf16.mxu0 0
    %945 = vmatpush1.bf16.msra.mxu0 0
    %946 = vmatprep.subr.bf16.mxu0 0
    %947 = vmatpush1.bf16.msra.mxu0 0
    %948 = vmatprep.subr.bf16.mxu0 0
    %949 = vmatpush1.bf16.msra.mxu0 0
    %950 = vmatprep.subr.bf16.mxu0 0
    %951 = vmatpush1.bf16.msra.mxu0 0
    %952 = vmatprep.subr.bf16.mxu0 0
    %953 = vmatpush1.bf16.msra.mxu0 0
    %954 = vmatprep.mubr.bf16.mxu0 0
    %955 = vmatmul.mubr.bf16.gmra.mrb[0].mxu0 %v850
    %v956 = vpop.f32.mrb[0].mxu0
    %v957 = vadd.f32 %v872, %v956
    %v958 = vpop.f32.mrb[0].mxu0
    %v959 = vpop.f32.mrb[0].mxu0
    %v960 = vpop.f32.mrb[0].mxu0
    %961 = vdwg.mxu0
    %962 = vmax.xlane.f32.xlu0 %v957
    %v963 = vpop.xlane.xlu0 %962
    %v964 = vsub.f32 %v957, %v963
    %v965 = vmul.f32 %v964, 1.442695
    %v966 = vpow.pop %v965
    %967 = vadd.xlane.f32.xlu0 %v966
    %v968 = vpop.xlane.xlu0 %967
    %v969 = vlog2.pop %v968
    %v970 = vmul.f32 %v969, 0.6931472
    %v971 = vsub.f32 %v964, %v970
    %972 = vst [vmem:[%s7] sm:$0xff] %v971
    // Predicated region
    $region34: #{_classifier_forward_padded.1} parent=1 // pred_check
      _
    $region35: #{_classifier_forward_padded.1} parent=1 // pred_check_branch
      %974 = sbr.rel (0) target = $region37
    $region36: #{_classifier_forward_padded.1} parent=1 // pred_region
      _
    $region37: #{_classifier_forward_padded.1} parent=1 // pred_fallthru
      _
    // Predicated region
    $region38: #{_classifier_forward_padded.1} parent=1 // pred_check
      _
    $region39: #{_classifier_forward_padded.1} parent=1 // pred_check_branch
      %976 = sbr.rel (0) target = $region41
    $region40: #{_classifier_forward_padded.1} parent=1 // pred_region
      _
    $region41: #{_classifier_forward_padded.1} parent=1 // pred_fallthru
      _
    %977 = vsyncpa [#allocation3], 1

</llo_original>
